<compile_context>
chip_gen: v7x
topology: tpu7x:2x2x1
jax: 0.10.0
libtpu: 0.0.40
codegen_flags: <defaults>
</compile_context>

<pallas_src>
import functools

import jax
import jax.numpy as jnp
from jax.experimental import pallas as pl
from jax.experimental.pallas import tpu as pltpu

_LN_EPS = 1e-6      # timm LayerNorm2d default eps
_NEG_INF = -1e30    # finite "masked logit" value (avoids inf-inf NaNs)


def _round_up(v, m):
    return (v + m - 1) // m * m


def _vmem_capacity_bytes():
    """Physical VMEM per TensorCore (generation-aware); conservative fallback."""
    try:
        info = pltpu.get_tpu_info()
        for name in ("vmem_capacity_bytes", "vmem_bytes", "vmem_size_bytes"):
            v = getattr(info, name, None)
            if v:
                return int(v)
    except Exception:
        pass
    return 64 * 1024 * 1024   # safe on every generation (v7x has 64 MiB)


def _mlp_gate_col(context, w1_ref, b1_ref, g_ref, beta_ref, w2_ref, b2_ref):
    """ConvMlp (fc1 -> LayerNorm -> ReLU -> fc2) + sigmoid, column-major.

    context: (C, 1) float32. Returns gate (C, 1) float32.  Column-major keeps
    the original PyTorch parameter layouts and avoids any relayout of the
    (C, 1) context produced by the big contraction.
    """
    h = jnp.dot(w1_ref[...], context,
                preferred_element_type=jnp.float32) + b1_ref[...]       # (rd, 1)
    mu = jnp.mean(h, axis=0, keepdims=True)
    var = jnp.mean((h - mu) ** 2, axis=0, keepdims=True)
    h = (h - mu) * jax.lax.rsqrt(var + _LN_EPS)
    h = h * g_ref[...] + beta_ref[...]
    h = jnp.maximum(h, 0.0)
    mlp = jnp.dot(w2_ref[...], h,
                  preferred_element_type=jnp.float32) + b2_ref[...]     # (C, 1)
    return jax.nn.sigmoid(mlp)


# ----------------------------------------------------------------------------
# Fused single-pass kernel: whole (C, HW) slab per grid step, read x once.
# ----------------------------------------------------------------------------
def _gc_fused_kernel(x_ref, wa_ref, ba_ref, w1_ref, b1_ref, g_ref, beta_ref,
                     w2_ref, b2_ref, o_ref):
    x = x_ref[0]                                           # (C, HW), native dtype
    wa = wa_ref[...].astype(x.dtype)                       # (1, C)

    # conv_attn: (1,C) @ (C,HW) -> (1,HW) on the MXU, f32 accumulation.
    logits = jnp.dot(wa, x, preferred_element_type=jnp.float32) + ba_ref[0, 0]

    m = jnp.max(logits, axis=-1, keepdims=True)            # (1, 1)
    p = jnp.exp(logits - m)                                 # (1, HW) f32
    l = jnp.sum(p, axis=-1, keepdims=True)                  # (1, 1)

    # Context: contract HW of x(C,HW) with p^T(HW,1) -> (C,1).  Only the tiny
    # (1,HW) probability row is transposed, never the big x slab.
    ctx = jax.lax.dot_general(x, p.astype(x.dtype), (((1,), (1,)), ((), ())),
                              preferred_element_type=jnp.float32)       # (C, 1)
    context = ctx * pl.reciprocal(l, approx=False)

    gate = _mlp_gate_col(context, w1_ref, b1_ref, g_ref, beta_ref,
                         w2_ref, b2_ref)                                # (C, 1)
    o_ref[0] = (x * gate.astype(x.dtype)).astype(o_ref.dtype)


# ----------------------------------------------------------------------------
# Streaming two-pass kernels (large slabs).
# ----------------------------------------------------------------------------
def _gc_reduce_kernel(x_ref, wa_ref, ba_ref, w1_ref, b1_ref, g_ref, beta_ref,
                      w2_ref, b2_ref, gate_ref, m_ref, l_ref, acc_ref,
                      *, hw, tile, need_mask):
    t = pl.program_id(1)

    @pl.when(t == 0)
    def _():
        m_ref[...] = jnp.full_like(m_ref, _NEG_INF)
        l_ref[...] = jnp.zeros_like(l_ref)
        acc_ref[...] = jnp.zeros_like(acc_ref)

    x = x_ref[0]                                            # (C, T), native dtype
    if need_mask:
        # Only the ragged last tile has out-of-range columns; their content is
        # undefined (padded read), so zero them (p is exactly 0 there, but
        # 0 * NaN would poison the context dot) and mask their logits.
        pos = t * tile + jax.lax.broadcasted_iota(jnp.int32, (1, tile), 1)
        valid = pos < hw                                    # (1, T)
        x = jnp.where(valid, x, jnp.zeros_like(x))

    wa = wa_ref[...].astype(x.dtype)                        # (1, C)
    logits = jnp.dot(wa, x, preferred_element_type=jnp.float32) + ba_ref[0, 0]
    if need_mask:
        logits = jnp.where(valid, logits, _NEG_INF)

    # Online softmax over HW; denominator folded into the context accumulator.
    m_prev = m_ref[...]                                     # (1, 1)
    m_new = jnp.maximum(m_prev, jnp.max(logits, axis=-1, keepdims=True))
    corr = jnp.exp(m_prev - m_new)                          # (1, 1)
    p = jnp.exp(logits - m_new)                             # (1, T) f32
    l_ref[...] = corr * l_ref[...] + jnp.sum(p, axis=-1, keepdims=True)
    ctx = jax.lax.dot_general(x, p.astype(x.dtype), (((1,), (1,)), ((), ())),
                              preferred_element_type=jnp.float32)       # (C, 1)
    acc_ref[...] = corr * acc_ref[...] + ctx
    m_ref[...] = m_new

    @pl.when(t == pl.num_programs(1) - 1)
    def _():
        context = acc_ref[...] * pl.reciprocal(l_ref[...], approx=False)
        gate = _mlp_gate_col(context, w1_ref, b1_ref, g_ref, beta_ref,
                             w2_ref, b2_ref)                            # (C, 1)
        gate_ref[0] = gate.astype(gate_ref.dtype)


def _gc_apply_kernel(x_ref, gate_ref, o_ref):
    # Pure native-dtype load-mul-store (no upcasts): keeps the apply pass on
    # the HBM roofline on all generations (v5e has a single vst slot).
    o_ref[0] = (x_ref[0] * gate_ref[0]).astype(o_ref.dtype)


# ----------------------------------------------------------------------------
# Wrapper
# ----------------------------------------------------------------------------
def global_context(x, params, *, force_streaming=False, max_tile=2048):
    """x: (B, C, H, W), NCHW (same as the PyTorch module). Returns same shape."""
    B, C, H, W = x.shape
    HW = H * W
    wa, ba, w1, b1, g, beta, w2, b2 = params
    rd = w1.shape[0]
    ba_k = ba.reshape(1, 1).astype(jnp.float32)             # scalar bias -> SMEM

    itemsize = jnp.dtype(x.dtype).itemsize
    x2 = x.reshape(B, C, HW)                                 # free relabeling

    # Generation-aware VMEM budget (v7x: 64 MiB physical, v5e/v6e: 128 MiB).
    vmem_cap = _vmem_capacity_bytes()
    vmem_limit = max(32 * 1024 * 1024, (vmem_cap * 3) // 4)  # 48 MiB / 96 MiB

    # -------- Fused single-pass fast path: read x once, write out once. -----
    slab_bytes = C * HW * itemsize
    fused_ok = (not force_streaming) and (
        4 * slab_bytes + (2 << 20) <= vmem_limit - (8 << 20))

    if fused_ok:
        def rep1(shape):
            return pl.BlockSpec(shape, lambda b: (0,) * len(shape))

        out = pl.pallas_call(
            _gc_fused_kernel,
            out_shape=jax.ShapeDtypeStruct((B, C, HW), x.dtype),
            grid=(B,),
            in_specs=[
                pl.BlockSpec((1, C, HW), lambda b: (b, 0, 0)),   # x slab
                rep1((1, C)),                                    # conv_attn w
                pl.BlockSpec(memory_space=pltpu.MemorySpace.SMEM),  # conv_attn b
                rep1((rd, C)),                                   # fc1 weight
                rep1((rd, 1)),                                   # fc1 bias
                rep1((rd, 1)),                                   # LN gamma
                rep1((rd, 1)),                                   # LN beta
                rep1((C, rd)),                                   # fc2 weight
                rep1((C, 1)),                                    # fc2 bias
            ],
            out_specs=pl.BlockSpec((1, C, HW), lambda b: (b, 0, 0)),
            compiler_params=pltpu.CompilerParams(
                dimension_semantics=("parallel",),
                vmem_limit_bytes=vmem_limit),
        )(x2, wa, ba_k, w1, b1, g, beta, w2, b2)
        return out.reshape(B, C, H, W)

    # -------- Streaming two-pass path (large slabs). -------------------------
    # Spatial tiling: lane-dense (multiple of 128) and VMEM-budgeted.
    tile_budget = vmem_limit // 8                 # per-tile x bytes (6 / 12 MiB)
    max_tile = max(128, _round_up(max_tile, 128))
    tile = min(max_tile, _round_up(HW, 128))
    while tile > 128 and C * tile * itemsize > tile_budget:
        tile = max(128, _round_up(tile // 2, 128))
    n_t = pl.cdiv(HW, tile)
    need_mask = (HW % tile) != 0                  # statically known

    def rep(shape):
        return pl.BlockSpec(shape, lambda b, t: (0,) * len(shape))

    # Pass 1: online-softmax reduction over HW -> per-(batch, channel) gate.
    gate = pl.pallas_call(
        functools.partial(_gc_reduce_kernel, hw=HW, tile=tile,
                          need_mask=need_mask),
        out_shape=jax.ShapeDtypeStruct((B, C, 1), x.dtype),
        grid=(B, n_t),
        in_specs=[
            pl.BlockSpec((1, C, tile), lambda b, t: (b, 0, t)),  # x tile
            rep((1, C)),                                         # conv_attn w
            pl.BlockSpec(memory_space=pltpu.MemorySpace.SMEM),   # conv_attn b
            rep((rd, C)),                                        # fc1 weight
            rep((rd, 1)),                                        # fc1 bias
            rep((rd, 1)),                                        # LN gamma
            rep((rd, 1)),                                        # LN beta
            rep((C, rd)),                                        # fc2 weight
            rep((C, 1)),                                         # fc2 bias
        ],
        out_specs=pl.BlockSpec((1, C, 1), lambda b, t: (b, 0, 0)),
        scratch_shapes=[
            pltpu.VMEM((1, 1), jnp.float32),   # running max
            pltpu.VMEM((1, 1), jnp.float32),   # running softmax denominator
            pltpu.VMEM((C, 1), jnp.float32),   # context accumulator (column)
        ],
        compiler_params=pltpu.CompilerParams(
            dimension_semantics=("parallel", "arbitrary"),
            vmem_limit_bytes=vmem_limit),
    )(x2, wa, ba_k, w1, b1, g, beta, w2, b2)

    # Pass 2: apply the per-channel gate, tiled over HW, fully parallel.
    # Ragged last tile: padded reads / masked writes handled by Pallas.
    out = pl.pallas_call(
        _gc_apply_kernel,
        out_shape=jax.ShapeDtypeStruct((B, C, HW), x.dtype),
        grid=(B, n_t),
        in_specs=[
            pl.BlockSpec((1, C, tile), lambda b, t: (b, 0, t)),
            pl.BlockSpec((1, C, 1), lambda b, t: (b, 0, 0)),
        ],
        out_specs=pl.BlockSpec((1, C, tile), lambda b, t: (b, 0, t)),
        compiler_params=pltpu.CompilerParams(
            dimension_semantics=("parallel", "parallel"),
            vmem_limit_bytes=vmem_limit),
    )(x2, gate)

    return out.reshape(B, C, H, W)


def make_params(key, C):
    """Deterministic synthetic parameters matching the PyTorch shapes."""
    # rd_channels = make_divisible(C * 1/8, divisor=1, round_limit=0.0)
    rd = max(1, int(C / 8.0 + 0.5))
    k = jax.random.split(key, 8)
    wa = jax.random.normal(k[0], (1, C), jnp.float32) * jnp.sqrt(2.0 / C)
    ba = jax.random.normal(k[1], (1, 1), jnp.float32) * 0.1
    w1 = jax.random.normal(k[2], (rd, C), jnp.float32) * 0.2
    b1 = jax.random.normal(k[3], (rd, 1), jnp.float32) * 0.1
    g = jnp.ones((rd, 1), jnp.float32)      # LayerNorm weight
    beta = jnp.zeros((rd, 1), jnp.float32)  # LayerNorm bias
    w2 = jax.random.normal(k[4], (C, rd), jnp.float32) * 0.2
    b2 = jax.random.normal(k[5], (C, 1), jnp.float32) * 0.1
    return (wa, ba, w1, b1, g, beta, w2, b2)


def ref_forward(x, params):
    """Plain-JAX reference mirroring the PyTorch forward (fuse_scale path)."""
    wa, ba, w1, b1, g, beta, w2, b2 = params
    B, C, H, W = x.shape
    attn = jnp.einsum('bchw,c->bhw', x, wa[0]).reshape(B, H * W) + ba[0, 0]
    attn = jax.nn.softmax(attn, axis=-1)
    context = jnp.einsum('bcs,bs->bc', x.reshape(B, C, H * W), attn)
    h = context @ w1.T + b1[:, 0]
    mu = h.mean(-1, keepdims=True)
    var = ((h - mu) ** 2).mean(-1, keepdims=True)
    h = (h - mu) / jnp.sqrt(var + _LN_EPS) * g[:, 0] + beta[:, 0]
    h = jnp.maximum(h, 0.0)
    mlp = h @ w2.T + b2[:, 0]
    gate = jax.nn.sigmoid(mlp)
    return x * gate[:, :, None, None]


if __name__ == "__main__":
    key = jax.random.PRNGKey(0)
    # Second config exercises the non-128-multiple HW path (14*14 = 196).
    for (B, C, H, W) in [(2, 16, 16, 16), (2, 24, 14, 14)]:
        kx, kp = jax.random.split(jax.random.fold_in(key, C))
        x = jax.random.normal(kx, (B, C, H, W), jnp.float32)
        params = make_params(kp, C)
        ref = ref_forward(x, params)

        # Fused single-pass fast path (the production path at these shapes).
        out = jax.block_until_ready(global_context(x, params))
        assert out.shape == (B, C, H, W)
        err = float(jnp.max(jnp.abs(out - ref)))
        assert jnp.allclose(out, ref, rtol=1e-4, atol=1e-5), ("fused", C, H, W, err)

        # Streaming two-pass path with small tiles: exercises the online
        # softmax across multiple HW tiles and the ragged-last-tile masking.
        out2 = jax.block_until_ready(
            global_context(x, params, force_streaming=True, max_tile=128))
        err2 = float(jnp.max(jnp.abs(out2 - ref)))
        assert jnp.allclose(out2, ref, rtol=1e-4, atol=1e-5), ("stream", C, H, W, err2)
    print("KERNEL_OK")
</pallas_src>

<mosaic_0001>
module attributes {stable_mosaic.version = 11 : i64} {
  func.func @_gc_fused_kernel(%arg0: i32, %arg1: memref<1x16x256xf32, #tpu.memory_space<vmem>>, %arg2: memref<1x16xf32, #tpu.memory_space<vmem>>, %arg3: memref<1x1xf32, #tpu.memory_space<smem>>, %arg4: memref<2x16xf32, #tpu.memory_space<vmem>>, %arg5: memref<2x1xf32, #tpu.memory_space<vmem>>, %arg6: memref<2x1xf32, #tpu.memory_space<vmem>>, %arg7: memref<2x1xf32, #tpu.memory_space<vmem>>, %arg8: memref<16x2xf32, #tpu.memory_space<vmem>>, %arg9: memref<16x1xf32, #tpu.memory_space<vmem>>, %arg10: memref<1x16x256xf32, #tpu.memory_space<vmem>>) attributes {dimension_semantics = [#tpu.dimension_semantics<parallel>], iteration_bounds = array<i64: 2>, scalar_prefetch = 0 : i64, scratch_operands = 0 : i64, tpu.core_type = #tpu.core_type<tc>, window_params = [{transform_indices = @transform_0, window_bounds = array<i64: 1, 16, 256>}, {pipeline_mode = #tpu.pipeline_mode<synchronous>, transform_indices = @transform_1, window_bounds = array<i64: 1, 16>}, {transform_indices = @transform_2, window_bounds = array<i64: 1, 1>}, {pipeline_mode = #tpu.pipeline_mode<synchronous>, transform_indices = @transform_3, window_bounds = array<i64: 2, 16>}, {pipeline_mode = #tpu.pipeline_mode<synchronous>, transform_indices = @transform_4, window_bounds = array<i64: 2, 1>}, {pipeline_mode = #tpu.pipeline_mode<synchronous>, transform_indices = @transform_5, window_bounds = array<i64: 2, 1>}, {pipeline_mode = #tpu.pipeline_mode<synchronous>, transform_indices = @transform_6, window_bounds = array<i64: 2, 1>}, {pipeline_mode = #tpu.pipeline_mode<synchronous>, transform_indices = @transform_7, window_bounds = array<i64: 16, 2>}, {pipeline_mode = #tpu.pipeline_mode<synchronous>, transform_indices = @transform_8, window_bounds = array<i64: 16, 1>}, {transform_indices = @transform_9, window_bounds = array<i64: 1, 16, 256>}]} {
    %c0 = arith.constant 0 : index
    %c0_0 = arith.constant 0 : index
    %c0_1 = arith.constant 0 : index
    %0 = vector.load %arg1[%c0, %c0_0, %c0_1] : memref<1x16x256xf32, #tpu.memory_space<vmem>>, vector<1x16x256xf32>
    %1 = vector.shape_cast %0 : vector<1x16x256xf32> to vector<16x256xf32>
    %c0_2 = arith.constant 0 : index
    %c0_3 = arith.constant 0 : index
    %2 = vector.load %arg2[%c0_2, %c0_3] : memref<1x16xf32, #tpu.memory_space<vmem>>, vector<1x16xf32>
    %cst = arith.constant dense<0.000000e+00> : vector<1x256xf32>
    %3 = tpu.matmul %2, %1, %cst {dimension_numbers = #tpu.dot_dimension_numbers<[1], [0], [0], [1], [0, 0, 1, 1], [], []>} : vector<1x16xf32>, vector<16x256xf32>, vector<1x256xf32> -> vector<1x256xf32>
    %c0_4 = arith.constant 0 : index
    %c0_5 = arith.constant 0 : index
    %4 = memref.load %arg3[%c0_4, %c0_5] : memref<1x1xf32, #tpu.memory_space<smem>>
    %5 = vector.broadcast %4 : f32 to vector<1x256xf32>
    %6 = arith.addf %3, %5 : vector<1x256xf32>
    %cst_6 = arith.constant dense<0xFF800000> : vector<1xf32>
    %7 = vector.multi_reduction <maximumf>, %6, %cst_6 [1] : vector<1x256xf32> to vector<1xf32>
    %8 = vector.shape_cast %7 : vector<1xf32> to vector<1x1xf32>
    %9 = vector.broadcast %8 : vector<1x1xf32> to vector<1x256xf32>
    %10 = arith.subf %6, %9 : vector<1x256xf32>
    %11 = math.exp %10 : vector<1x256xf32>
    %cst_7 = arith.constant dense<0.000000e+00> : vector<1xf32>
    %12 = vector.multi_reduction <add>, %11, %cst_7 [1] : vector<1x256xf32> to vector<1xf32>
    %13 = vector.shape_cast %12 : vector<1xf32> to vector<1x1xf32>
    %cst_8 = arith.constant dense<0.000000e+00> : vector<16x1xf32>
    %14 = tpu.matmul %1, %11, %cst_8 {dimension_numbers = #tpu.dot_dimension_numbers<[1], [1], [0], [0], [0, 0, 1, 0], [], []>} : vector<16x256xf32>, vector<1x256xf32>, vector<16x1xf32> -> vector<16x1xf32>
    %15 = tpu.reciprocal %13 : vector<1x1xf32> -> vector<1x1xf32>
    %16 = vector.broadcast %15 : vector<1x1xf32> to vector<16x1xf32>
    %17 = arith.mulf %14, %16 : vector<16x1xf32>
    %c0_9 = arith.constant 0 : index
    %c0_10 = arith.constant 0 : index
    %18 = vector.load %arg4[%c0_9, %c0_10] : memref<2x16xf32, #tpu.memory_space<vmem>>, vector<2x16xf32>
    %cst_11 = arith.constant dense<0.000000e+00> : vector<2x1xf32>
    %19 = tpu.matmul %18, %17, %cst_11 {dimension_numbers = #tpu.dot_dimension_numbers<[1], [0], [0], [1], [0, 0, 1, 1], [], []>} : vector<2x16xf32>, vector<16x1xf32>, vector<2x1xf32> -> vector<2x1xf32>
    %c0_12 = arith.constant 0 : index
    %c0_13 = arith.constant 0 : index
    %20 = vector.load %arg5[%c0_12, %c0_13] : memref<2x1xf32, #tpu.memory_space<vmem>>, vector<2x1xf32>
    %21 = arith.addf %19, %20 : vector<2x1xf32>
    %cst_14 = arith.constant dense<0.000000e+00> : vector<1xf32>
    %22 = vector.multi_reduction <add>, %21, %cst_14 [0] : vector<2x1xf32> to vector<1xf32>
    %23 = vector.shape_cast %22 : vector<1xf32> to vector<1x1xf32>
    %cst_15 = arith.constant 2.000000e+00 : f32
    %24 = vector.broadcast %cst_15 : f32 to vector<1x1xf32>
    %25 = arith.divf %23, %24 : vector<1x1xf32>
    %26 = vector.broadcast %25 : vector<1x1xf32> to vector<2x1xf32>
    %27 = arith.subf %21, %26 : vector<2x1xf32>
    %28 = arith.mulf %27, %27 : vector<2x1xf32>
    %cst_16 = arith.constant dense<0.000000e+00> : vector<1xf32>
    %29 = vector.multi_reduction <add>, %28, %cst_16 [0] : vector<2x1xf32> to vector<1xf32>
    %30 = vector.shape_cast %29 : vector<1xf32> to vector<1x1xf32>
    %cst_17 = arith.constant 2.000000e+00 : f32
    %31 = vector.broadcast %cst_17 : f32 to vector<1x1xf32>
    %32 = arith.divf %30, %31 : vector<1x1xf32>
    %33 = vector.broadcast %25 : vector<1x1xf32> to vector<2x1xf32>
    %34 = arith.subf %21, %33 : vector<2x1xf32>
    %cst_18 = arith.constant 9.99999997E-7 : f32
    %35 = vector.broadcast %cst_18 : f32 to vector<1x1xf32>
    %36 = arith.addf %32, %35 : vector<1x1xf32>
    %37 = math.rsqrt %36 : vector<1x1xf32>
    %38 = vector.broadcast %37 : vector<1x1xf32> to vector<2x1xf32>
    %39 = arith.mulf %34, %38 : vector<2x1xf32>
    %c0_19 = arith.constant 0 : index
    %c0_20 = arith.constant 0 : index
    %40 = vector.load %arg6[%c0_19, %c0_20] : memref<2x1xf32, #tpu.memory_space<vmem>>, vector<2x1xf32>
    %41 = arith.mulf %39, %40 : vector<2x1xf32>
    %c0_21 = arith.constant 0 : index
    %c0_22 = arith.constant 0 : index
    %42 = vector.load %arg7[%c0_21, %c0_22] : memref<2x1xf32, #tpu.memory_space<vmem>>, vector<2x1xf32>
    %43 = arith.addf %41, %42 : vector<2x1xf32>
    %cst_23 = arith.constant 0.000000e+00 : f32
    %44 = vector.broadcast %cst_23 : f32 to vector<2x1xf32>
    %45 = arith.maximumf %43, %44 : vector<2x1xf32>
    %c0_24 = arith.constant 0 : index
    %c0_25 = arith.constant 0 : index
    %46 = vector.load %arg8[%c0_24, %c0_25] : memref<16x2xf32, #tpu.memory_space<vmem>>, vector<16x2xf32>
    %cst_26 = arith.constant dense<0.000000e+00> : vector<16x1xf32>
    %47 = tpu.matmul %46, %45, %cst_26 {dimension_numbers = #tpu.dot_dimension_numbers<[1], [0], [0], [1], [0, 0, 1, 1], [], []>} : vector<16x2xf32>, vector<2x1xf32>, vector<16x1xf32> -> vector<16x1xf32>
    %c0_27 = arith.constant 0 : index
    %c0_28 = arith.constant 0 : index
    %48 = vector.load %arg9[%c0_27, %c0_28] : memref<16x1xf32, #tpu.memory_space<vmem>>, vector<16x1xf32>
    %49 = arith.addf %47, %48 : vector<16x1xf32>
    %50 = arith.negf %49 : vector<16x1xf32>
    %51 = math.exp %50 : vector<16x1xf32>
    %cst_29 = arith.constant 1.000000e+00 : f32
    %52 = vector.broadcast %cst_29 : f32 to vector<16x1xf32>
    %53 = arith.addf %52, %51 : vector<16x1xf32>
    %54 = arith.divf %52, %53 : vector<16x1xf32>
    %55 = vector.broadcast %54 : vector<16x1xf32> to vector<16x256xf32>
    %56 = arith.mulf %1, %55 : vector<16x256xf32>
    %c0_30 = arith.constant 0 : index
    %c0_31 = arith.constant 0 : index
    %c0_32 = arith.constant 0 : index
    %57 = vector.load %arg10[%c0_30, %c0_31, %c0_32] : memref<1x16x256xf32, #tpu.memory_space<vmem>>, vector<1x16x256xf32>
    %58 = vector.shape_cast %57 : vector<1x16x256xf32> to vector<16x256xf32>
    %59 = vector.shape_cast %56 : vector<16x256xf32> to vector<1x16x256xf32>
    tpu.vector_store %arg10[%c0_30, %c0_31, %c0_32], %59 {strides = array<i32>} : memref<1x16x256xf32, #tpu.memory_space<vmem>>, vector<1x16x256xf32>,
    return
  }
  func.func @transform_0(%arg0: i32) -> (i32, i32, i32) {
    %c0_i32 = arith.constant 0 : i32
    %c0_i32_0 = arith.constant 0 : i32
    %c0_i32_1 = arith.constant 0 : i32
    return %arg0, %c0_i32, %c0_i32_0 : i32, i32, i32
  }
  func.func @transform_1(%arg0: i32) -> (i32, i32) {
    %c0_i32 = arith.constant 0 : i32
    %c0_i32_0 = arith.constant 0 : i32
    %c0_i32_1 = arith.constant 0 : i32
    return %c0_i32, %c0_i32_0 : i32, i32
  }
  func.func @transform_2(%arg0: i32) -> (i32, i32) {
    %c0_i32 = arith.constant 0 : i32
    %c0_i32_0 = arith.constant 0 : i32
    %c0_i32_1 = arith.constant 0 : i32
    return %c0_i32, %c0_i32_0 : i32, i32
  }
  func.func @transform_3(%arg0: i32) -> (i32, i32) {
    %c0_i32 = arith.constant 0 : i32
    %c0_i32_0 = arith.constant 0 : i32
    %c0_i32_1 = arith.constant 0 : i32
    return %c0_i32, %c0_i32_0 : i32, i32
  }
  func.func @transform_4(%arg0: i32) -> (i32, i32) {
    %c0_i32 = arith.constant 0 : i32
    %c0_i32_0 = arith.constant 0 : i32
    %c0_i32_1 = arith.constant 0 : i32
    return %c0_i32, %c0_i32_0 : i32, i32
  }
  func.func @transform_5(%arg0: i32) -> (i32, i32) {
    %c0_i32 = arith.constant 0 : i32
    %c0_i32_0 = arith.constant 0 : i32
    %c0_i32_1 = arith.constant 0 : i32
    return %c0_i32, %c0_i32_0 : i32, i32
  }
  func.func @transform_6(%arg0: i32) -> (i32, i32) {
    %c0_i32 = arith.constant 0 : i32
    %c0_i32_0 = arith.constant 0 : i32
    %c0_i32_1 = arith.constant 0 : i32
    return %c0_i32, %c0_i32_0 : i32, i32
  }
  func.func @transform_7(%arg0: i32) -> (i32, i32) {
    %c0_i32 = arith.constant 0 : i32
    %c0_i32_0 = arith.constant 0 : i32
    %c0_i32_1 = arith.constant 0 : i32
    return %c0_i32, %c0_i32_0 : i32, i32
  }
  func.func @transform_8(%arg0: i32) -> (i32, i32) {
    %c0_i32 = arith.constant 0 : i32
    %c0_i32_0 = arith.constant 0 : i32
    %c0_i32_1 = arith.constant 0 : i32
    return %c0_i32, %c0_i32_0 : i32, i32
  }
  func.func @transform_9(%arg0: i32) -> (i32, i32, i32) {
    %c0_i32 = arith.constant 0 : i32
    %c0_i32_0 = arith.constant 0 : i32
    %c0_i32_1 = arith.constant 0 : i32
    return %arg0, %c0_i32, %c0_i32_0 : i32, i32, i32
  }
}

</mosaic_0001>

<llo_original>
// kernel: tpu_custom_call.1
$region0: #{tpu_custom_call.1}
  #allocation0 [shape = 'u32[]', space=smem, size = 0x4, offset = 0x4, fixed_abs, tag = 'smem constant byte address 0x4 - core index']
  #allocation1 [shape = 'u32[144,128]{1,0:T(1,128)}', space=vmem, size = 0x12000, scoped, tag = 'internal scratch']
  #allocation2 [shape = 'f32[1,1]{1,0:T(1,128)S(6)}', space=smem, size = 0x200, scoped, tag = 'scoped memory for tpu_custom_call.1']
  %s0 = inlined_call_operand.hbm [shape: f32[2,16,256], index: 0, kind: input, shape index: {}]
  %s1 = inlined_call_operand.vmem [shape: f32[1,16], index: 1, kind: input, shape index: {}]
  %s2 = inlined_call_operand.<no memory space> [shape: f32[1,1], index: 2, kind: input, shape index: {}]
  %s3 = inlined_call_operand.vmem [shape: f32[2,16], index: 3, kind: input, shape index: {}]
  %s4 = inlined_call_operand.vmem [shape: f32[2,1], index: 4, kind: input, shape index: {}]
  %s5 = inlined_call_operand.vmem [shape: f32[2,1], index: 5, kind: input, shape index: {}]
  %s6 = inlined_call_operand.vmem [shape: f32[2,1], index: 6, kind: input, shape index: {}]
  %s7 = inlined_call_operand.vmem [shape: f32[16,2], index: 7, kind: input, shape index: {}]
  %s8 = inlined_call_operand.vmem [shape: f32[16,1], index: 8, kind: input, shape index: {}]
  %s9 = inlined_call_operand.hbm [shape: f32[2,16,256], index: 9, kind: output, shape index: {}]
  %s10 = sld [smem:[#allocation0]]
  $region73: #{tpu_custom_call.1} parent=0
    _
  %s12 = ssub.s32 1, %s10
  %s13 = scalar_select 0, %s12, %s10
  %14 = sst [smem:[#allocation2]] %s2
  $region1: #{tpu_custom_call.1} parent=0
    #allocation3 [shape = 'u8[32768]{0}', space=vmem, size = 0x8000, scoped, tag = 'input window, operand 0']
    #allocation4 [shape = 's32[2]{0}', space=sflag, size = 0x8, scoped, tag = 'scoped memory for tpu_custom_call.1']
    #allocation5 [shape = 's32[2]{0}', space=sflag, size = 0x8, scoped, tag = 'scoped memory for tpu_custom_call.1']
    #allocation6 [shape = 'u8[32768]{0}', space=vmem, size = 0x8000, scoped, tag = 'output window, operand 0']
    %15 = vsyncpa [#allocation4], 0
    %s16 = scalar_lea.sflag [#allocation4], 1
    %17 = vsyncpa %s16, 0
    %18 = vsyncpa [#allocation5], 0
    %s19 = scalar_lea.sflag [#allocation5], 1
    %20 = vsyncpa %s19, 0
    loop: start=0, step=1, limit=4
    $region2: #{tpu_custom_call.1} parent=1 // loop_pre_header
      _
    $region3: #{tpu_custom_call.1} parent=1 // loop_header
      %s22 = sphi 0, %s26
      %p23 = scmp.ge.s32.totalorder %s22, 4
      %s32 = sphi 0, %s34
      %s35 = sphi 0, %s32
      %s36 = sphi 0, %s35
      %s52 = sphi 0, %s36
      %s56 = sphi 0, %s56
      %s58 = sphi 0, %s56
      %s59 = sphi 0, %s58
      %s73 = sphi 0, %s59
      %s77 = sphi 0, %s77
      %s79 = sphi 0, %s77
      %s80 = sphi 0, %s79
      %s94 = sphi 0, %s80
      %s98 = sphi 0, %s98
      %s100 = sphi 0, %s98
      %s101 = sphi 0, %s100
      %s115 = sphi 0, %s101
      %s119 = sphi 0, %s119
      %s121 = sphi 0, %s119
      %s122 = sphi 0, %s121
      %s136 = sphi 0, %s122
      %s140 = sphi 0, %s140
      %s142 = sphi 0, %s140
      %s143 = sphi 0, %s142
      %s157 = sphi 0, %s143
      %s161 = sphi 0, %s161
      %s163 = sphi 0, %s161
      %s164 = sphi 0, %s163
      %s178 = sphi 0, %s164
      %s182 = sphi 0, %s182
      %s184 = sphi 0, %s182
      %s185 = sphi 0, %s184
      %s199 = sphi 0, %s185
      %s203 = sphi 0, %s203
      %s205 = sphi 0, %s203
      %s206 = sphi 0, %s205
      %s220 = sphi 0, %s206
      %s226 = sphi 0, %s228
      %s229 = sphi 0, %s226
      %s230 = sphi 0, %s229
      %s246 = sphi 0, %s230
    $region4: #{tpu_custom_call.1} parent=1 // loop_header_branch
      %25 = sbr.rel (%p23) target = $region8
    $region5: #{tpu_custom_call.1} parent=1 // loop_body
      %s27 = ssub.s32 %s22, 1
      %s28 = ssub.s32 %s22, 2
      %s29 = sadd.s32 %s22, 1
      %s30 = ssub.s32 %s22, %s29
      %p31 = scmp.eq.s32.totalorder %s30, 0
      %s33 = sadd.s32 %s32, 1
      %s34 = scalar_select %p31, %s32, %s33
      %p37 = pneg %p31
      %p38 = scmp.eq.s32.totalorder %s22, 1
      %p39 = por %p37, %p38
      %p40 = scmp.ne.s32.totalorder %s32, %s35
      %p41 = scmp.eq.s32.totalorder %s22, 0
      %p42 = por %p40, %p41
      %p43 = scmp.ne.s32.totalorder %s32, %s35
      %p44 = scmp.eq.s32.totalorder %s27, 1
      %p45 = por %p43, %p44
      %p46 = scmp.ne.s32.totalorder %s35, %s36
      %p47 = scmp.eq.s32.totalorder %s27, 0
      %p48 = por %p46, %p47
      %p49 = scmp.ne.s32.totalorder %s35, %s36
      %p50 = scmp.eq.s32.totalorder %s28, 1
      %p51 = por %p49, %p50
      %p53 = scmp.ne.s32.totalorder %s36, %s52
      %p54 = scmp.eq.s32.totalorder %s28, 0
      %p55 = por %p53, %p54
      %s57 = sadd.s32 %s56, 1
      %p60 = scmp.eq.s32.totalorder %s22, 1
      %p61 = scmp.ne.s32.totalorder %s56, %s58
      %p62 = scmp.eq.s32.totalorder %s22, 0
      %p63 = por %p61, %p62
      %p64 = scmp.ne.s32.totalorder %s56, %s58
      %p65 = scmp.eq.s32.totalorder %s27, 1
      %p66 = por %p64, %p65
      %p67 = scmp.ne.s32.totalorder %s58, %s59
      %p68 = scmp.eq.s32.totalorder %s27, 0
      %p69 = por %p67, %p68
      %p70 = scmp.ne.s32.totalorder %s58, %s59
      %p71 = scmp.eq.s32.totalorder %s28, 1
      %p72 = por %p70, %p71
      %p74 = scmp.ne.s32.totalorder %s59, %s73
      %p75 = scmp.eq.s32.totalorder %s28, 0
      %p76 = por %p74, %p75
      %s78 = sadd.s32 %s77, 1
      %p81 = scmp.eq.s32.totalorder %s22, 1
      %p82 = scmp.ne.s32.totalorder %s77, %s79
      %p83 = scmp.eq.s32.totalorder %s22, 0
      %p84 = por %p82, %p83
      %p85 = scmp.ne.s32.totalorder %s77, %s79
      %p86 = scmp.eq.s32.totalorder %s27, 1
      %p87 = por %p85, %p86
      %p88 = scmp.ne.s32.totalorder %s79, %s80
      %p89 = scmp.eq.s32.totalorder %s27, 0
      %p90 = por %p88, %p89
      %p91 = scmp.ne.s32.totalorder %s79, %s80
      %p92 = scmp.eq.s32.totalorder %s28, 1
      %p93 = por %p91, %p92
      %p95 = scmp.ne.s32.totalorder %s80, %s94
      %p96 = scmp.eq.s32.totalorder %s28, 0
      %p97 = por %p95, %p96
      %s99 = sadd.s32 %s98, 1
      %p102 = scmp.eq.s32.totalorder %s22, 1
      %p103 = scmp.ne.s32.totalorder %s98, %s100
      %p104 = scmp.eq.s32.totalorder %s22, 0
      %p105 = por %p103, %p104
      %p106 = scmp.ne.s32.totalorder %s98, %s100
      %p107 = scmp.eq.s32.totalorder %s27, 1
      %p108 = por %p106, %p107
      %p109 = scmp.ne.s32.totalorder %s100, %s101
      %p110 = scmp.eq.s32.totalorder %s27, 0
      %p111 = por %p109, %p110
      %p112 = scmp.ne.s32.totalorder %s100, %s101
      %p113 = scmp.eq.s32.totalorder %s28, 1
      %p114 = por %p112, %p113
      %p116 = scmp.ne.s32.totalorder %s101, %s115
      %p117 = scmp.eq.s32.totalorder %s28, 0
      %p118 = por %p116, %p117
      %s120 = sadd.s32 %s119, 1
      %p123 = scmp.eq.s32.totalorder %s22, 1
      %p124 = scmp.ne.s32.totalorder %s119, %s121
      %p125 = scmp.eq.s32.totalorder %s22, 0
      %p126 = por %p124, %p125
      %p127 = scmp.ne.s32.totalorder %s119, %s121
      %p128 = scmp.eq.s32.totalorder %s27, 1
      %p129 = por %p127, %p128
      %p130 = scmp.ne.s32.totalorder %s121, %s122
      %p131 = scmp.eq.s32.totalorder %s27, 0
      %p132 = por %p130, %p131
      %p133 = scmp.ne.s32.totalorder %s121, %s122
      %p134 = scmp.eq.s32.totalorder %s28, 1
      %p135 = por %p133, %p134
      %p137 = scmp.ne.s32.totalorder %s122, %s136
      %p138 = scmp.eq.s32.totalorder %s28, 0
      %p139 = por %p137, %p138
      %s141 = sadd.s32 %s140, 1
      %p144 = scmp.eq.s32.totalorder %s22, 1
      %p145 = scmp.ne.s32.totalorder %s140, %s142
      %p146 = scmp.eq.s32.totalorder %s22, 0
      %p147 = por %p145, %p146
      %p148 = scmp.ne.s32.totalorder %s140, %s142
      %p149 = scmp.eq.s32.totalorder %s27, 1
      %p150 = por %p148, %p149
      %p151 = scmp.ne.s32.totalorder %s142, %s143
      %p152 = scmp.eq.s32.totalorder %s27, 0
      %p153 = por %p151, %p152
      %p154 = scmp.ne.s32.totalorder %s142, %s143
      %p155 = scmp.eq.s32.totalorder %s28, 1
      %p156 = por %p154, %p155
      %p158 = scmp.ne.s32.totalorder %s143, %s157
      %p159 = scmp.eq.s32.totalorder %s28, 0
      %p160 = por %p158, %p159
      %s162 = sadd.s32 %s161, 1
      %p165 = scmp.eq.s32.totalorder %s22, 1
      %p166 = scmp.ne.s32.totalorder %s161, %s163
      %p167 = scmp.eq.s32.totalorder %s22, 0
      %p168 = por %p166, %p167
      %p169 = scmp.ne.s32.totalorder %s161, %s163
      %p170 = scmp.eq.s32.totalorder %s27, 1
      %p171 = por %p169, %p170
      %p172 = scmp.ne.s32.totalorder %s163, %s164
      %p173 = scmp.eq.s32.totalorder %s27, 0
      %p174 = por %p172, %p173
      %p175 = scmp.ne.s32.totalorder %s163, %s164
      %p176 = scmp.eq.s32.totalorder %s28, 1
      %p177 = por %p175, %p176
      %p179 = scmp.ne.s32.totalorder %s164, %s178
      %p180 = scmp.eq.s32.totalorder %s28, 0
      %p181 = por %p179, %p180
      %s183 = sadd.s32 %s182, 1
      %p186 = scmp.eq.s32.totalorder %s22, 1
      %p187 = scmp.ne.s32.totalorder %s182, %s184
      %p188 = scmp.eq.s32.totalorder %s22, 0
      %p189 = por %p187, %p188
      %p190 = scmp.ne.s32.totalorder %s182, %s184
      %p191 = scmp.eq.s32.totalorder %s27, 1
      %p192 = por %p190, %p191
      %p193 = scmp.ne.s32.totalorder %s184, %s185
      %p194 = scmp.eq.s32.totalorder %s27, 0
      %p195 = por %p193, %p194
      %p196 = scmp.ne.s32.totalorder %s184, %s185
      %p197 = scmp.eq.s32.totalorder %s28, 1
      %p198 = por %p196, %p197
      %p200 = scmp.ne.s32.totalorder %s185, %s199
      %p201 = scmp.eq.s32.totalorder %s28, 0
      %p202 = por %p200, %p201
      %s204 = sadd.s32 %s203, 1
      %p207 = scmp.eq.s32.totalorder %s22, 1
      %p208 = scmp.ne.s32.totalorder %s203, %s205
      %p209 = scmp.eq.s32.totalorder %s22, 0
      %p210 = por %p208, %p209
      %p211 = scmp.ne.s32.totalorder %s203, %s205
      %p212 = scmp.eq.s32.totalorder %s27, 1
      %p213 = por %p211, %p212
      %p214 = scmp.ne.s32.totalorder %s205, %s206
      %p215 = scmp.eq.s32.totalorder %s27, 0
      %p216 = por %p214, %p215
      %p217 = scmp.ne.s32.totalorder %s205, %s206
      %p218 = scmp.eq.s32.totalorder %s28, 1
      %p219 = por %p217, %p218
      %p221 = scmp.ne.s32.totalorder %s206, %s220
      %p222 = scmp.eq.s32.totalorder %s28, 0
      %p223 = por %p221, %p222
      %s224 = ssub.s32 %s22, %s29
      %p225 = scmp.eq.s32.totalorder %s224, 0
      %s227 = sadd.s32 %s226, 1
      %s228 = scalar_select %p225, %s226, %s227
      %p231 = pneg %p225
      %p232 = scmp.eq.s32.totalorder %s22, 1
      %p233 = por %p231, %p232
      %p234 = scmp.ne.s32.totalorder %s226, %s229
      %p235 = scmp.eq.s32.totalorder %s22, 0
      %p236 = por %p234, %p235
      %p237 = scmp.ne.s32.totalorder %s226, %s229
      %p238 = scmp.eq.s32.totalorder %s27, 1
      %p239 = por %p237, %p238
      %p240 = scmp.ne.s32.totalorder %s229, %s230
      %p241 = scmp.eq.s32.totalorder %s27, 0
      %p242 = por %p240, %p241
      %p243 = scmp.ne.s32.totalorder %s229, %s230
      %p244 = scmp.eq.s32.totalorder %s28, 1
      %p245 = por %p243, %p244
      %p247 = scmp.ne.s32.totalorder %s230, %s246
      %p248 = scmp.eq.s32.totalorder %s28, 0
      %p249 = por %p247, %p248
      %p250 = scmp.le.s32.totalorder 1, %s22
      %p251 = scmp.lt.s32.totalorder %s22, 3
      %p252 = pnand %p250, %p251
      %p253 = pneg %p252
      // Predicated region
      $region9: #{tpu_custom_call.1} parent=5 // pred_check
        _
      $region10: #{tpu_custom_call.1} parent=5 // pred_check_branch
        %255 = sbr.rel (%p252) target = $region12
      $region11: #{tpu_custom_call.1} parent=5 // pred_region
        %s256 = ssub.s32 %s22, 1
        // Predicated region
        $region13: #{tpu_custom_call.1} parent=11 // pred_check
          %p257 = pneg %p69
        $region14: #{tpu_custom_call.1} parent=11 // pred_check_branch
          %259 = sbr.rel (%p257) target = $region16
        $region15: #{tpu_custom_call.1} parent=11 // pred_region
          _
        $region16: #{tpu_custom_call.1} parent=11 // pred_fallthru
          _
        // Predicated region
        $region17: #{tpu_custom_call.1} parent=11 // pred_check
          %p260 = pneg %p90
        $region18: #{tpu_custom_call.1} parent=11 // pred_check_branch
          %262 = sbr.rel (%p260) target = $region20
        $region19: #{tpu_custom_call.1} parent=11 // pred_region
          _
        $region20: #{tpu_custom_call.1} parent=11 // pred_fallthru
          _
        // Predicated region
        $region21: #{tpu_custom_call.1} parent=11 // pred_check
          %p263 = pneg %p111
        $region22: #{tpu_custom_call.1} parent=11 // pred_check_branch
          %265 = sbr.rel (%p263) target = $region24
        $region23: #{tpu_custom_call.1} parent=11 // pred_region
          _
        $region24: #{tpu_custom_call.1} parent=11 // pred_fallthru
          _
        // Predicated region
        $region25: #{tpu_custom_call.1} parent=11 // pred_check
          %p266 = pneg %p132
        $region26: #{tpu_custom_call.1} parent=11 // pred_check_branch
          %268 = sbr.rel (%p266) target = $region28
        $region27: #{tpu_custom_call.1} parent=11 // pred_region
          _
        $region28: #{tpu_custom_call.1} parent=11 // pred_fallthru
          _
        // Predicated region
        $region29: #{tpu_custom_call.1} parent=11 // pred_check
          %p269 = pneg %p153
        $region30: #{tpu_custom_call.1} parent=11 // pred_check_branch
          %271 = sbr.rel (%p269) target = $region32
        $region31: #{tpu_custom_call.1} parent=11 // pred_region
          _
        $region32: #{tpu_custom_call.1} parent=11 // pred_fallthru
          _
        // Predicated region
        $region33: #{tpu_custom_call.1} parent=11 // pred_check
          %p272 = pneg %p174
        $region34: #{tpu_custom_call.1} parent=11 // pred_check_branch
          %274 = sbr.rel (%p272) target = $region36
        $region35: #{tpu_custom_call.1} parent=11 // pred_region
          _
        $region36: #{tpu_custom_call.1} parent=11 // pred_fallthru
          _
        // Predicated region
        $region37: #{tpu_custom_call.1} parent=11 // pred_check
          %p275 = pneg %p195
        $region38: #{tpu_custom_call.1} parent=11 // pred_check_branch
          %277 = sbr.rel (%p275) target = $region40
        $region39: #{tpu_custom_call.1} parent=11 // pred_region
          _
        $region40: #{tpu_custom_call.1} parent=11 // pred_fallthru
          _
        // Predicated region
        $region41: #{tpu_custom_call.1} parent=11 // pred_check
          %p278 = pneg %p216
        $region42: #{tpu_custom_call.1} parent=11 // pred_check_branch
          %280 = sbr.rel (%p278) target = $region44
        $region43: #{tpu_custom_call.1} parent=11 // pred_region
          _
        $region44: #{tpu_custom_call.1} parent=11 // pred_fallthru
          _
      $region12: #{tpu_custom_call.1} parent=5 // pred_fallthru
        _
      %p281 = scmp.lt.s32.totalorder %s22, 2
      // Predicated region
      $region45: #{tpu_custom_call.1} parent=5 // pred_check
        %p282 = pneg %p281
      $region46: #{tpu_custom_call.1} parent=5 // pred_check_branch
        %284 = sbr.rel (%p282) target = $region48
      $region47: #{tpu_custom_call.1} parent=5 // pred_region
        // Predicated region
        $region49: #{tpu_custom_call.1} parent=47 // pred_check
          %p285 = pneg %p42
        $region50: #{tpu_custom_call.1} parent=47 // pred_check_branch
          %287 = sbr.rel (%p285) target = $region52
        $region51: #{tpu_custom_call.1} parent=47 // pred_region
          %s288 = sand.u32 %s32, 1
          %s289 = scalar_lea.sflag [#allocation4], %s288
          %s290 = sand.u32 %s32, 1
          %s291 = smul.addr %s290, 32
          %s292 = scalar_lea.vmem [#allocation3], %s291
          %s294 = ssub.s32 512, 512
          %295 = vsyncadd %s289, %s294
          %s296 = smul.addr %s22, 4
          %s297 = smul.addr %s296, 128
          %s298 = scalar_lea.hbm %s0, %s297
          %s299 = sshll.u32 %s292, 4
          %s300 = int_to_ptr.vmem [resolvable:$true] %s299
          %305 = dma.hbm_to_vmem [thread:$0]  %s298, 512, %s300, %s289, 256, 256, 16
        $region52: #{tpu_custom_call.1} parent=47 // pred_fallthru
          _
      $region48: #{tpu_custom_call.1} parent=5 // pred_fallthru
        _
      %p306 = scmp.le.s32.totalorder 1, %s22
      %p307 = scmp.lt.s32.totalorder %s22, 3
      %p308 = pnand %p306, %p307
      %p309 = pneg %p308
      // Predicated region
      $region53: #{tpu_custom_call.1} parent=5 // pred_check
        _
      $region54: #{tpu_custom_call.1} parent=5 // pred_check_branch
        %311 = sbr.rel (%p308) target = $region56
      $region55: #{tpu_custom_call.1} parent=5 // pred_region
        %s312 = ssub.s32 %s22, 1
        %s313 = sand.u32 %s35, 1
        %s314 = scalar_lea.sflag [#allocation4], %s313
        %s315 = sand.u32 %s35, 1
        %s316 = smul.addr %s315, 32
        %s317 = scalar_lea.vmem [#allocation3], %s316
        // Predicated region
        $region57: #{tpu_custom_call.1} parent=55 // pred_check
          %p318 = pneg %p48
        $region58: #{tpu_custom_call.1} parent=55 // pred_check_branch
          %320 = sbr.rel (%p318) target = $region60
        $region59: #{tpu_custom_call.1} parent=55 // pred_region
          %321 = dma.done %s314, 512
        $region60: #{tpu_custom_call.1} parent=55 // pred_fallthru
          _
        %s322 = sand.u32 %s35, 1
        %s323 = scalar_lea.sflag [#allocation4], %s322
        %s324 = sand.u32 %s35, 1
        %s325 = smul.addr %s324, 32
        %s326 = scalar_lea.vmem [#allocation3], %s325
        %p327 = pneg %p48
        %p328 = pneg %p45
        %p329 = pneg %p69
        %p330 = pneg %p66
        %p331 = pneg %p90
        %p332 = pneg %p87
        %p333 = pneg %p111
        %p334 = pneg %p108
        %p335 = pneg %p132
        %p336 = pneg %p129
        %p337 = pneg %p153
        %p338 = pneg %p150
        %p339 = pneg %p174
        %p340 = pneg %p171
        %p341 = pneg %p195
        %p342 = pneg %p192
        %p343 = pneg %p216
        %p344 = pneg %p213
        %p345 = pneg %p242
        %p346 = pneg %p239
        %s347 = sand.u32 %s229, 1
        %s348 = scalar_lea.sflag [#allocation5], %s347
        %s349 = sand.u32 %s229, 1
        %s350 = smul.addr %s349, 32
        %s351 = scalar_lea.vmem [#allocation6], %s350
        %v352 = vld [vmem:[%s317] sm:$0xff]
        %v353 = vld [vmem:[%s317 + $0x8] sm:$0xff]
        %v354 = vld [vmem:[%s317 + $0x10] sm:$0xff]
        %v355 = vld [vmem:[%s317 + $0x18] sm:$0xff]
        %v356 = vld [vmem:[%s1] sm:$0x1]
        %s357 = sld [smem:[#allocation2]]
        %v358 = vstv %s357
        %vm359 = vcmask 130048
        %v361 = vsel %vm359, %v356, 0
        %363 = vmatprep.subr.mxu0 %v353
        %364 = vmatpush1.msra.mxu0 %v352
        %365 = vmatprep.subr.mxu0 %v355
        %366 = vmatpush1.msra.mxu0 %v354
        %367 = vmatprep.subr.mxu0 0.0
        %368 = vmatpush1.msra.mxu0 0.0
        %369 = vmatprep.subr.mxu0 0.0
        %370 = vmatpush1.msra.mxu0 0.0
        %371 = vmatprep.subr.mxu0 0.0
        %372 = vmatpush1.msra.mxu0 0.0
        %373 = vmatprep.subr.mxu0 0.0
        %374 = vmatpush1.msra.mxu0 0.0
        %375 = vmatprep.subr.mxu0 0.0
        %376 = vmatpush1.msra.mxu0 0.0
        %377 = vmatprep.subr.mxu0 0.0
        %378 = vmatpush1.msra.mxu0 0.0
        %379 = vmatprep.subr.mxu0 0.0
        %380 = vmatpush1.msra.mxu0 0.0
        %381 = vmatprep.subr.mxu0 0.0
        %382 = vmatpush1.msra.mxu0 0.0
        %383 = vmatprep.subr.mxu0 0.0
        %384 = vmatpush1.msra.mxu0 0.0
        %385 = vmatprep.subr.mxu0 0.0
        %386 = vmatpush1.msra.mxu0 0.0
        %387 = vmatprep.subr.mxu0 0.0
        %388 = vmatpush1.msra.mxu0 0.0
        %389 = vmatprep.subr.mxu0 0.0
        %390 = vmatpush1.msra.mxu0 0.0
        %391 = vmatprep.subr.mxu0 0.0
        %392 = vmatpush1.msra.mxu0 0.0
        %393 = vmatprep.subr.mxu0 0.0
        %394 = vmatpush1.msra.mxu0 0.0
        %395 = vmatprep.subr.mxu0 0.0
        %396 = vmatpush1.msra.mxu0 0.0
        %397 = vmatprep.subr.mxu0 0.0
        %398 = vmatpush1.msra.mxu0 0.0
        %399 = vmatprep.subr.mxu0 0.0
        %400 = vmatpush1.msra.mxu0 0.0
        %401 = vmatprep.subr.mxu0 0.0
        %402 = vmatpush1.msra.mxu0 0.0
        %403 = vmatprep.subr.mxu0 0.0
        %404 = vmatpush1.msra.mxu0 0.0
        %405 = vmatprep.subr.mxu0 0.0
        %406 = vmatpush1.msra.mxu0 0.0
        %407 = vmatprep.subr.mxu0 0.0
        %408 = vmatpush1.msra.mxu0 0.0
        %409 = vmatprep.subr.mxu0 0.0
        %410 = vmatpush1.msra.mxu0 0.0
        %411 = vmatprep.subr.mxu0 0.0
        %412 = vmatpush1.msra.mxu0 0.0
        %413 = vmatprep.subr.mxu0 0.0
        %414 = vmatpush1.msra.mxu0 0.0
        %415 = vmatprep.subr.mxu0 0.0
        %416 = vmatpush1.msra.mxu0 0.0
        %417 = vmatprep.subr.mxu0 0.0
        %418 = vmatpush1.msra.mxu0 0.0
        %419 = vmatprep.subr.mxu0 0.0
        %420 = vmatpush1.msra.mxu0 0.0
        %421 = vmatprep.subr.mxu0 0.0
        %422 = vmatpush1.msra.mxu0 0.0
        %423 = vmatprep.subr.mxu0 0.0
        %424 = vmatpush1.msra.mxu0 0.0
        %425 = vmatprep.subr.mxu0 0.0
        %426 = vmatpush1.msra.mxu0 0.0
        %427 = vmatprep.mubr.f32.mxu0 0.0
        %428 = vmatmul.mubr.f32.gmra.mrb[0].mxu0 %v361
        %v429 = vpop.f32.mrb[0].mxu0
        %v430 = vadd.f32 %v358, %v429
        %v431 = vpop.f32.mrb[0].mxu0
        %v432 = vadd.f32 %v358, %v431
        %433 = vdwg.mxu0
        %vm434 = vcmask 1040384
        %v435 = vsel %vm434, %v430, -inf
        %v436 = vsel %vm434, %v432, -inf
        %v437 = vmax.f32 %v435, %v436
        %438 = vmax.xlane.f32.xlu0 %v437
        %v439 = vpop.xlane.xlu0 %438
        %v440 = vsub.f32 %v430, %v439
        %v441 = vsub.f32 %v432, %v439
        %v442 = vmul.f32 %v440, 1.442695
        %v443 = vpow.pop %v442
        %v444 = vmul.f32 %v441, 1.442695
        %v445 = vpow.pop %v444
        %v446 = vsel %vm434, %v443, 0.0
        %v447 = vsel %vm434, %v445, 0.0
        %v448 = vadd.f32 %v446, %v447
        %449 = vadd.xlane.f32.xlu0 %v448
        %v450 = vpop.xlane.xlu0 %449
        %v451 = vlaneseq
        %v452 = vshrl.u32 %v451, 7
        %v453 = vsub.s32 0, %v452
        %v454 = vrot.slane %v443, %v453
        %v455 = vlaneseq
        %v456 = vshrl.u32 %v455, 7
        %v457 = vsub.s32 0, %v456
        %v458 = vrot.slane %v445, %v457
        %v459 = vmul.f32 %v352, %v454
        %v460 = vmul.f32 %v353, %v458
        %v461 = vmul.f32 %v354, %v454
        %v462 = vmul.f32 %v355, %v458
        %v463 = vadd.f32 %v459, %v460
        %464 = vadd.xlane.f32.xlu0 %v463
        %v465 = vpop.xlane.xlu0 %464
        %v466 = vadd.f32 %v461, %v462
        %467 = vadd.xlane.f32.xlu0 %v466
        %v468 = vpop.xlane.xlu0 %467
        %v469 = vrcp.pop %v450
        %v470 = vlaneseq
        %v471 = vshrl.u32 %v470, 7
        %v472 = vsub.s32 0, %v471
        %v473 = vrot.slane %v469, %v472
        %v474 = vmul.f32 %v465, %v473
        %v475 = vmul.f32 %v468, %v473
        %v476 = vld [vmem:[%s3] sm:$0x3]
        %v477 = vld [vmem:[%s4] sm:$0x3]
        %v479 = vsel %vm359, %v476, 0
        %481 = vmatprep.subr.mxu0 0.0
        %482 = vmatpush1.msra.mxu0 %v474
        %483 = vmatprep.subr.mxu0 0.0
        %484 = vmatpush1.msra.mxu0 %v475
        %485 = vmatprep.subr.mxu0 0.0
        %486 = vmatpush1.msra.mxu0 0.0
        %487 = vmatprep.subr.mxu0 0.0
        %488 = vmatpush1.msra.mxu0 0.0
        %489 = vmatprep.subr.mxu0 0.0
        %490 = vmatpush1.msra.mxu0 0.0
        %491 = vmatprep.subr.mxu0 0.0
        %492 = vmatpush1.msra.mxu0 0.0
        %493 = vmatprep.subr.mxu0 0.0
        %494 = vmatpush1.msra.mxu0 0.0
        %495 = vmatprep.subr.mxu0 0.0
        %496 = vmatpush1.msra.mxu0 0.0
        %497 = vmatprep.subr.mxu0 0.0
        %498 = vmatpush1.msra.mxu0 0.0
        %499 = vmatprep.subr.mxu0 0.0
        %500 = vmatpush1.msra.mxu0 0.0
        %501 = vmatprep.subr.mxu0 0.0
        %502 = vmatpush1.msra.mxu0 0.0
        %503 = vmatprep.subr.mxu0 0.0
        %504 = vmatpush1.msra.mxu0 0.0
        %505 = vmatprep.subr.mxu0 0.0
        %506 = vmatpush1.msra.mxu0 0.0
        %507 = vmatprep.subr.mxu0 0.0
        %508 = vmatpush1.msra.mxu0 0.0
        %509 = vmatprep.subr.mxu0 0.0
        %510 = vmatpush1.msra.mxu0 0.0
        %511 = vmatprep.subr.mxu0 0.0
        %512 = vmatpush1.msra.mxu0 0.0
        %513 = vmatprep.subr.mxu0 0.0
        %514 = vmatpush1.msra.mxu0 0.0
        %515 = vmatprep.subr.mxu0 0.0
        %516 = vmatpush1.msra.mxu0 0.0
        %517 = vmatprep.subr.mxu0 0.0
        %518 = vmatpush1.msra.mxu0 0.0
        %519 = vmatprep.subr.mxu0 0.0
        %520 = vmatpush1.msra.mxu0 0.0
        %521 = vmatprep.subr.mxu0 0.0
        %522 = vmatpush1.msra.mxu0 0.0
        %523 = vmatprep.subr.mxu0 0.0
        %524 = vmatpush1.msra.mxu0 0.0
        %525 = vmatprep.subr.mxu0 0.0
        %526 = vmatpush1.msra.mxu0 0.0
        %527 = vmatprep.subr.mxu0 0.0
        %528 = vmatpush1.msra.mxu0 0.0
        %529 = vmatprep.subr.mxu0 0.0
        %530 = vmatpush1.msra.mxu0 0.0
        %531 = vmatprep.subr.mxu0 0.0
        %532 = vmatpush1.msra.mxu0 0.0
        %533 = vmatprep.subr.mxu0 0.0
        %534 = vmatpush1.msra.mxu0 0.0
        %535 = vmatprep.subr.mxu0 0.0
        %536 = vmatpush1.msra.mxu0 0.0
        %537 = vmatprep.subr.mxu0 0.0
        %538 = vmatpush1.msra.mxu0 0.0
        %539 = vmatprep.subr.mxu0 0.0
        %540 = vmatpush1.msra.mxu0 0.0
        %541 = vmatprep.subr.mxu0 0.0
        %542 = vmatpush1.msra.mxu0 0.0
        %543 = vmatprep.subr.mxu0 0.0
        %544 = vmatpush1.msra.mxu0 0.0
        %545 = vmatprep.mubr.f32.mxu0 0.0
        %546 = vmatmul.mubr.f32.gmra.mrb[0].mxu0 %v479
        %v547 = vpop.f32.mrb[0].mxu0
        %v548 = vadd.f32 %v477, %v547
        %v549 = vpop.f32.mrb[0].mxu0
        %550 = vdwg.mxu0
        %vm551 = vcmask 1024
        %v552 = vsel %vm551, %v548, 0.0
        %v553 = vrot.slane %v552, 4
        %v554 = vadd.f32 %v552, %v553
        %v555 = vrot.slane %v554, 2
        %v556 = vadd.f32 %v554, %v555
        %v557 = vrot.slane %v556, 1
        %v558 = vadd.f32 %v556, %v557
        %v559 = vrcp.pop 2.0
        %v560 = vmul.f32 %v558, %v559
        %v561 = vsub.f32 %v548, %v560
        %v562 = vmul.f32 %v561, %v561
        %v563 = vsel %vm551, %v562, 0.0
        %v564 = vrot.slane %v563, 4
        %v565 = vadd.f32 %v563, %v564
        %v566 = vrot.slane %v565, 2
        %v567 = vadd.f32 %v565, %v566
        %v568 = vrot.slane %v567, 1
        %v569 = vadd.f32 %v567, %v568
        %v570 = vmul.f32 %v569, %v559
        %v571 = vadd.f32 %v570, 1e-06
        %v572 = vrsqrt.pop %v571
        %v573 = vmul.f32 %v561, %v572
        %v574 = vld [vmem:[%s5] sm:$0x3]
        %v575 = vmul.f32 %v573, %v574
        %v576 = vld [vmem:[%s6] sm:$0x3]
        %v577 = vadd.f32 %v575, %v576
        %v578 = vmax.f32 %v577, 0.0
        %v579 = vld [vmem:[%s7] sm:$0xff]
        %v580 = vld [vmem:[%s7 + $0x8] sm:$0xff]
        %v581 = vld [vmem:[%s8] sm:$0xff]
        %v582 = vld [vmem:[%s8 + $0x8] sm:$0xff]
        %vm583 = vcmask 15360
        %v585 = vsel %vm583, %v579, 0
        %v588 = vsel %vm583, %v580, 0
        %vm590 = vcmask 1041408
        %v592 = vsel %vm590, %v578, 0
        %594 = vmatprep.subr.mxu0 0.0
        %595 = vmatpush1.msra.mxu0 %v592
        %596 = vmatprep.subr.mxu0 0.0
        %597 = vmatpush1.msra.mxu0 0.0
        %598 = vmatprep.subr.mxu0 0.0
        %599 = vmatpush1.msra.mxu0 0.0
        %600 = vmatprep.subr.mxu0 0.0
        %601 = vmatpush1.msra.mxu0 0.0
        %602 = vmatprep.subr.mxu0 0.0
        %603 = vmatpush1.msra.mxu0 0.0
        %604 = vmatprep.subr.mxu0 0.0
        %605 = vmatpush1.msra.mxu0 0.0
        %606 = vmatprep.subr.mxu0 0.0
        %607 = vmatpush1.msra.mxu0 0.0
        %608 = vmatprep.subr.mxu0 0.0
        %609 = vmatpush1.msra.mxu0 0.0
        %610 = vmatprep.subr.mxu0 0.0
        %611 = vmatpush1.msra.mxu0 0.0
        %612 = vmatprep.subr.mxu0 0.0
        %613 = vmatpush1.msra.mxu0 0.0
        %614 = vmatprep.subr.mxu0 0.0
        %615 = vmatpush1.msra.mxu0 0.0
        %616 = vmatprep.subr.mxu0 0.0
        %617 = vmatpush1.msra.mxu0 0.0
        %618 = vmatprep.subr.mxu0 0.0
        %619 = vmatpush1.msra.mxu0 0.0
        %620 = vmatprep.subr.mxu0 0.0
        %621 = vmatpush1.msra.mxu0 0.0
        %622 = vmatprep.subr.mxu0 0.0
        %623 = vmatpush1.msra.mxu0 0.0
        %624 = vmatprep.subr.mxu0 0.0
        %625 = vmatpush1.msra.mxu0 0.0
        %626 = vmatprep.subr.mxu0 0.0
        %627 = vmatpush1.msra.mxu0 0.0
        %628 = vmatprep.subr.mxu0 0.0
        %629 = vmatpush1.msra.mxu0 0.0
        %630 = vmatprep.subr.mxu0 0.0
        %631 = vmatpush1.msra.mxu0 0.0
        %632 = vmatprep.subr.mxu0 0.0
        %633 = vmatpush1.msra.mxu0 0.0
        %634 = vmatprep.subr.mxu0 0.0
        %635 = vmatpush1.msra.mxu0 0.0
        %636 = vmatprep.subr.mxu0 0.0
        %637 = vmatpush1.msra.mxu0 0.0
        %638 = vmatprep.subr.mxu0 0.0
        %639 = vmatpush1.msra.mxu0 0.0
        %640 = vmatprep.subr.mxu0 0.0
        %641 = vmatpush1.msra.mxu0 0.0
        %642 = vmatprep.subr.mxu0 0.0
        %643 = vmatpush1.msra.mxu0 0.0
        %644 = vmatprep.subr.mxu0 0.0
        %645 = vmatpush1.msra.mxu0 0.0
        %646 = vmatprep.subr.mxu0 0.0
        %647 = vmatpush1.msra.mxu0 0.0
        %648 = vmatprep.subr.mxu0 0.0
        %649 = vmatpush1.msra.mxu0 0.0
        %650 = vmatprep.subr.mxu0 0.0
        %651 = vmatpush1.msra.mxu0 0.0
        %652 = vmatprep.subr.mxu0 0.0
        %653 = vmatpush1.msra.mxu0 0.0
        %654 = vmatprep.subr.mxu0 0.0
        %655 = vmatpush1.msra.mxu0 0.0
        %656 = vmatprep.subr.mxu0 0.0
        %657 = vmatpush1.msra.mxu0 0.0
        %658 = vmatprep.mubr.f32.mxu0 0.0
        %659 = vmatmul.mubr.f32.gmra.mrb[0].mxu0 %v585
        %v660 = vpop.f32.mrb[0].mxu0
        %v661 = vadd.f32 %v581, %v660
        %v662 = vpop.f32.mrb[0].mxu0
        %663 = vmatprep.mubr.f32.mxu0 0.0
        %664 = vmatmul.mubr.f32.gmra.mrb[0].mxu0 %v588
        %v665 = vpop.f32.mrb[0].mxu0
        %v666 = vadd.f32 %v582, %v665
        %v667 = vpop.f32.mrb[0].mxu0
        %668 = vdwg.mxu0
        %v669 = vxor.u32 %v661, 2147483648
        %v670 = vxor.u32 %v666, 2147483648
        %v671 = vmul.f32 %v669, 1.442695
        %v672 = vpow.pop %v671
        %v673 = vmul.f32 %v670, 1.442695
        %v674 = vpow.pop %v673
        %v675 = vadd.f32 %v672, 1.0
        %v676 = vadd.f32 %v674, 1.0
        %v677 = vrcp.pop %v675
        %v678 = vmul.f32 1.0, %v677
        %v679 = vrcp.pop %v676
        %v680 = vmul.f32 1.0, %v679
        %682 = vset.pattern.permute.xlu0 0
        %683 = vperm.xlu0 %682, %v678
        %v684 = vpop.permute.xlu0 %683
        %687 = vset.pattern.permute.xlu0 0
        %688 = vperm.xlu0 %687, %v680
        %v689 = vpop.permute.xlu0 %688
        %v691 = vmul.f32 %v352, %v684
        %v692 = vmul.f32 %v353, %v684
        %v693 = vmul.f32 %v354, %v689
        %v694 = vmul.f32 %v355, %v689
        %695 = vst [vmem:[%s351] sm:$0xff] %v691
        %696 = vst [vmem:[%s351 + $0x8] sm:$0xff] %v692
        %697 = vst [vmem:[%s351 + $0x10] sm:$0xff] %v693
        %698 = vst [vmem:[%s351 + $0x18] sm:$0xff] %v694
        %s699 = sand.u32 %s229, 1
        %s700 = scalar_lea.sflag [#allocation5], %s699
        %s701 = sand.u32 %s229, 1
        %s702 = smul.addr %s701, 32
        %s703 = scalar_lea.vmem [#allocation6], %s702
        // Predicated region
        $region61: #{tpu_custom_call.1} parent=55 // pred_check
          %p704 = pneg %p239
        $region62: #{tpu_custom_call.1} parent=55 // pred_check_branch
          %706 = sbr.rel (%p704) target = $region64
        $region63: #{tpu_custom_call.1} parent=55 // pred_region
          %s708 = ssub.s32 512, 512
          %709 = vsyncadd %s700, %s708
          %s710 = smul.addr %s27, 4
          %s711 = smul.addr %s710, 128
          %s712 = scalar_lea.hbm %s9, %s711
          %s713 = sshll.u32 %s703, 4
          %s714 = int_to_ptr.vmem [resolvable:$true] %s713
          %719 = dma.vmem_to_hbm [thread:$0]  %s714, 512, %s712, %s700, 256, 256, 16
        $region64: #{tpu_custom_call.1} parent=55 // pred_fallthru
          _
      $region56: #{tpu_custom_call.1} parent=5 // pred_fallthru
        _
      %p720 = scmp.le.s32.totalorder 2, %s22
      // Predicated region
      $region65: #{tpu_custom_call.1} parent=5 // pred_check
        %p721 = pneg %p720
      $region66: #{tpu_custom_call.1} parent=5 // pred_check_branch
        %723 = sbr.rel (%p721) target = $region68
      $region67: #{tpu_custom_call.1} parent=5 // pred_region
        %s724 = ssub.s32 %s22, 2
        // Predicated region
        $region69: #{tpu_custom_call.1} parent=67 // pred_check
          %p725 = pneg %p245
        $region70: #{tpu_custom_call.1} parent=67 // pred_check_branch
          %727 = sbr.rel (%p725) target = $region72
        $region71: #{tpu_custom_call.1} parent=67 // pred_region
          %s728 = sand.u32 %s230, 1
          %s729 = scalar_lea.sflag [#allocation5], %s728
          %s730 = sand.u32 %s230, 1
          %s731 = smul.addr %s730, 32
          %s732 = scalar_lea.vmem [#allocation6], %s731
          %733 = dma.done %s729, 512
        $region72: #{tpu_custom_call.1} parent=67 // pred_fallthru
          _
      $region68: #{tpu_custom_call.1} parent=5 // pred_fallthru
        _
    $region6: #{tpu_custom_call.1} parent=1 // loop_footer
      %s26 = sadd.s32 1, %s22
    $region7: #{tpu_custom_call.1} parent=1 // loop_footer_branch
      %21 = sbr.rel target = $region3
    $region8: #{tpu_custom_call.1} parent=1 // loop_exit
      _
    %734 = vsyncpa [#allocation4], 1
    %s735 = scalar_lea.sflag [#allocation4], 1
    %736 = vsyncpa %s735, 1
    %737 = vsyncpa [#allocation5], 1
    %s738 = scalar_lea.sflag [#allocation5], 1
    %739 = vsyncpa %s738, 1

</llo_original>
